<compile_context>
chip_gen: v5e
topology: v5e:2x2
jax: 0.10.0
libtpu: 0.0.40
codegen_flags: <defaults>
</compile_context>

<pallas_src>
import functools

import jax
import jax.numpy as jnp
from jax.experimental import pallas as pl
from jax.experimental.pallas import tpu as pltpu


_LANE = 128


def _round_up(x, m):
    return ((x + m - 1) // m) * m


def _silu(x):
    return x * jax.nn.sigmoid(x)


def _flow_matching_kernel(x_ref, cond_ref, t_ref,
                          w1x_ref, w1c_ref, w1t_ref, b1_ref,
                          w2_ref, b2_ref, w3_ref, b3_ref,
                          o_ref):
    # x_ref:    (TB, in_dim)        cond_ref: (TB, cond_dim)   t_ref: (TB, 1)
    # w1x_ref:  (in_dim,   Hp)      w1c_ref:  (cond_dim, Hp)   w1t_ref: (1, Hp)
    # b1_ref:   (1, Hp)
    # w2_ref:   (Hp, Hp)            b2_ref:   (1, Hp)
    # w3_ref:   (Hp, Op)            b3_ref:   (1, Op)
    # o_ref:    (TB, Op)            (Hp, Op are multiples of 128 -> lane dense)
    wdt = w1x_ref.dtype

    # Layer 1: split GEMM replaces concat([x, cond, t], -1) of the reference.
    h1 = jnp.dot(x_ref[...].astype(wdt), w1x_ref[...],
                 preferred_element_type=jnp.float32)
    h1 = h1 + jnp.dot(cond_ref[...].astype(wdt), w1c_ref[...],
                      preferred_element_type=jnp.float32)
    # t is a single input column -> outer-product term, a cheap VPU broadcast FMA.
    h1 = h1 + t_ref[...].astype(jnp.float32) * w1t_ref[...].astype(jnp.float32)
    h1 = h1 + b1_ref[...].astype(jnp.float32)
    h1 = _silu(h1)

    # Layer 2.
    h2 = jnp.dot(h1.astype(w2_ref.dtype), w2_ref[...],
                 preferred_element_type=jnp.float32)
    h2 = _silu(h2 + b2_ref[...].astype(jnp.float32))

    # Layer 3 (output, lane-dense padded to Op).
    out = jnp.dot(h2.astype(w3_ref.dtype), w3_ref[...],
                  preferred_element_type=jnp.float32)
    out = out + b3_ref[...].astype(jnp.float32)
    o_ref[...] = out.astype(o_ref.dtype)


def prepare_params(params, in_dim, cond_dim, *, weight_dtype=None):
    """One-time weight prep: split W1 by input (x/cond/t) and zero-pad the
    hidden / output feature dims up to multiples of 128 lanes.

    Zero padding is exact: padded pre-activations are 0, SiLU(0)=0, and padded
    weight rows/cols contribute nothing downstream.
    `weight_dtype=jnp.bfloat16` halves weight traffic and feeds the MXU its
    native format on v6e/v7x (accumulation stays f32 in-kernel).
    """
    w1, b1, w2, b2, w3, b3 = params        # w: (fan_in, fan_out), b: (1, fan_out)
    hidden = w1.shape[1]
    out_dim = w3.shape[1]
    hp = _round_up(hidden, _LANE)
    op = _round_up(out_dim, _LANE)

    def pad2(a, rows, cols):
        return jnp.pad(a, ((0, rows - a.shape[0]), (0, cols - a.shape[1])))

    wcast = (lambda a: a.astype(weight_dtype)) if weight_dtype is not None else (lambda a: a)

    w1x = wcast(pad2(w1[:in_dim], in_dim, hp))
    w1c = wcast(pad2(w1[in_dim:in_dim + cond_dim], cond_dim, hp))
    # Keep the t-row and biases in f32: they run on the VPU (no bf16 VPU on v5e).
    w1t = pad2(w1[in_dim + cond_dim:in_dim + cond_dim + 1], 1, hp)
    b1p = pad2(b1, 1, hp)
    w2p = wcast(pad2(w2, hp, hp))
    b2p = pad2(b2, 1, hp)
    w3p = wcast(pad2(w3, hp, op))
    b3p = pad2(b3, 1, op)
    return (w1x, w1c, w1t, b1p, w2p, b2p, w3p, b3p)


@functools.partial(jax.jit, static_argnames=("out_dim", "block_b"))
def flow_matching_forward(x, t, cond, prepared, out_dim, block_b=512):
    """x: (B, in_dim), t: (B, 1), cond: (B, cond_dim); prepared = prepare_params(...)."""
    w1x, w1c, w1t, b1, w2, b2, w3, b3 = prepared
    B, in_dim = x.shape
    cond_dim = cond.shape[1]
    hp = w2.shape[1]         # padded hidden (multiple of 128)
    op = w3.shape[1]         # padded output (multiple of 128)

    # ---- batch tile selection: big tiles, multiple of 8, >=2 grid steps when
    # the batch allows it (so v7x's two TensorCores both get work). ----
    bb = _round_up(max(block_b, 8), 8)
    bb = min(bb, _round_up(B, 8))
    if B >= 16 and pl.cdiv(B, bb) < 2:
        bb = _round_up(pl.cdiv(B, 2), 8)
    grid = (pl.cdiv(B, bb),)

    itemsize = jnp.dtype(x.dtype).itemsize
    w_bytes = sum(a.size * jnp.dtype(a.dtype).itemsize
                  for a in (w1x, w1c, w1t, b1, w2, b2, w3, b3))

    # VMEM footprint estimate: double-buffered batch tiles + weights (x2 to be
    # conservative) + h1/h2 intermediates, with headroom.  Capped at 48 MiB so
    # it is always valid on v7x's 64 MiB VMEM; floored at 16 MiB.
    vmem_est = (2 * bb * (in_dim + cond_dim + 1) * itemsize
                + 2 * bb * op * itemsize
                + 2 * w_bytes
                + 4 * bb * hp * 4)
    vmem_limit = min(max(int(1.5 * vmem_est), 16 * 1024 * 1024), 48 * 1024 * 1024)

    # Advisory cost estimate so XLA schedules producers/consumers sensibly.
    flops = 2 * B * (in_dim * hp + cond_dim * hp + hp * hp + hp * op) + 2 * B * hp
    transcendentals = 2 * B * hp            # two sigmoids per row
    bytes_accessed = (B * (in_dim + cond_dim + 1) * itemsize
                      + w_bytes + B * op * itemsize)
    cost = pl.CostEstimate(flops=int(flops),
                           transcendentals=int(transcendentals),
                           bytes_accessed=int(bytes_accessed))

    # Weights / biases are small after padding: each grid step sees the full array.
    def full(a):
        return pl.BlockSpec(a.shape, lambda i: (0,) * a.ndim)

    out_padded = pl.pallas_call(
        _flow_matching_kernel,
        out_shape=jax.ShapeDtypeStruct((B, op), x.dtype),
        grid_spec=pltpu.PrefetchScalarGridSpec(
            num_scalar_prefetch=0,
            grid=grid,
            in_specs=[
                pl.BlockSpec((bb, in_dim), lambda i: (i, 0)),    # x tile
                pl.BlockSpec((bb, cond_dim), lambda i: (i, 0)),  # cond tile
                pl.BlockSpec((bb, 1), lambda i: (i, 0)),         # t tile
                full(w1x), full(w1c), full(w1t), full(b1),
                full(w2), full(b2), full(w3), full(b3),
            ],
            out_specs=pl.BlockSpec((bb, op), lambda i: (i, 0)),  # lane-dense store
        ),
        compiler_params=pltpu.CompilerParams(
            dimension_semantics=("parallel",),
            vmem_limit_bytes=vmem_limit),
        cost_estimate=cost,
    )(x, cond, t, w1x, w1c, w1t, b1, w2, b2, w3, b3)

    # Strip the lane padding back to the module's true output width.
    return out_padded[:, :out_dim]


def init_params(key, in_dim, cond_dim, hidden, dtype=jnp.float32):
    """Deterministic synthetic init (PyTorch-Linear-like uniform fan-in)."""
    d0 = in_dim + cond_dim + 1
    ks = jax.random.split(key, 6)

    def lin(kw, kb, fan_in, fan_out):
        bound = 1.0 / jnp.sqrt(fan_in)
        # stored transposed: (fan_in, fan_out) so the kernel does x @ W
        w = jax.random.uniform(kw, (fan_in, fan_out), dtype, -bound, bound)
        b = jax.random.uniform(kb, (1, fan_out), dtype, -bound, bound)
        return w, b

    w1, b1 = lin(ks[0], ks[1], d0, hidden)
    w2, b2 = lin(ks[2], ks[3], hidden, hidden)
    w3, b3 = lin(ks[4], ks[5], hidden, in_dim)
    return (w1, b1, w2, b2, w3, b3)


def reference_forward(x, t, cond, params):
    """Pure-JAX reference of the PyTorch module."""
    w1, b1, w2, b2, w3, b3 = params
    h = jnp.concatenate([x, cond, t], axis=-1)
    h = _silu(h @ w1 + b1)
    h = _silu(h @ w2 + b2)
    return h @ w3 + b3


if __name__ == "__main__":
    # Small shapes consistent with the module's forward signature.
    B, in_dim, cond_dim, hidden = 64, 16, 8, 32

    key = jax.random.PRNGKey(0)
    kx, kt, kc, kp = jax.random.split(key, 4)
    x = jax.random.normal(kx, (B, in_dim), jnp.float32)
    t = jax.random.uniform(kt, (B, 1), jnp.float32)
    cond = jax.random.normal(kc, (B, cond_dim), jnp.float32)

    params = init_params(kp, in_dim, cond_dim, hidden)
    # f32 demo (keeps 1e-5 tolerance); pass weight_dtype=jnp.bfloat16 on v6e/v7x.
    prepared = prepare_params(params, in_dim, cond_dim)

    out = flow_matching_forward(x, t, cond, prepared, out_dim=in_dim, block_b=512)
    out = jax.block_until_ready(out)

    ref = reference_forward(x, t, cond, params)
    assert out.shape == (B, in_dim), out.shape
    max_err = float(jnp.max(jnp.abs(out - ref)))
    assert jnp.allclose(out, ref, atol=1e-5, rtol=1e-5), max_err

    print("KERNEL_OK")
</pallas_src>

<mosaic_0001>
module attributes {stable_mosaic.version = 11 : i64} {
  func.func @_flow_matching_kernel(%arg0: i32, %arg1: memref<32x16xf32, #tpu.memory_space<vmem>>, %arg2: memref<32x8xf32, #tpu.memory_space<vmem>>, %arg3: memref<32x1xf32, #tpu.memory_space<vmem>>, %arg4: memref<16x128xf32, #tpu.memory_space<vmem>>, %arg5: memref<8x128xf32, #tpu.memory_space<vmem>>, %arg6: memref<1x128xf32, #tpu.memory_space<vmem>>, %arg7: memref<1x128xf32, #tpu.memory_space<vmem>>, %arg8: memref<128x128xf32, #tpu.memory_space<vmem>>, %arg9: memref<1x128xf32, #tpu.memory_space<vmem>>, %arg10: memref<128x128xf32, #tpu.memory_space<vmem>>, %arg11: memref<1x128xf32, #tpu.memory_space<vmem>>, %arg12: memref<32x128xf32, #tpu.memory_space<vmem>>) attributes {dimension_semantics = [#tpu.dimension_semantics<parallel>], iteration_bounds = array<i64: 2>, scalar_prefetch = 0 : i64, scratch_operands = 0 : i64, tpu.core_type = #tpu.core_type<tc>, window_params = [{transform_indices = @transform_0, window_bounds = array<i64: 32, 16>}, {transform_indices = @transform_1, window_bounds = array<i64: 32, 8>}, {transform_indices = @transform_2, window_bounds = array<i64: 32, 1>}, {pipeline_mode = #tpu.pipeline_mode<synchronous>, transform_indices = @transform_3, window_bounds = array<i64: 16, 128>}, {pipeline_mode = #tpu.pipeline_mode<synchronous>, transform_indices = @transform_4, window_bounds = array<i64: 8, 128>}, {pipeline_mode = #tpu.pipeline_mode<synchronous>, transform_indices = @transform_5, window_bounds = array<i64: 1, 128>}, {pipeline_mode = #tpu.pipeline_mode<synchronous>, transform_indices = @transform_6, window_bounds = array<i64: 1, 128>}, {pipeline_mode = #tpu.pipeline_mode<synchronous>, transform_indices = @transform_7, window_bounds = array<i64: 128, 128>}, {pipeline_mode = #tpu.pipeline_mode<synchronous>, transform_indices = @transform_8, window_bounds = array<i64: 1, 128>}, {pipeline_mode = #tpu.pipeline_mode<synchronous>, transform_indices = @transform_9, window_bounds = array<i64: 128, 128>}, {pipeline_mode = #tpu.pipeline_mode<synchronous>, transform_indices = @transform_10, window_bounds = array<i64: 1, 128>}, {transform_indices = @transform_11, window_bounds = array<i64: 32, 128>}]} {
    %c0 = arith.constant 0 : index
    %c0_0 = arith.constant 0 : index
    %0 = vector.load %arg1[%c0, %c0_0] : memref<32x16xf32, #tpu.memory_space<vmem>>, vector<32x16xf32>
    %c0_1 = arith.constant 0 : index
    %c0_2 = arith.constant 0 : index
    %1 = vector.load %arg4[%c0_1, %c0_2] : memref<16x128xf32, #tpu.memory_space<vmem>>, vector<16x128xf32>
    %cst = arith.constant dense<0.000000e+00> : vector<32x128xf32>
    %2 = tpu.matmul %0, %1, %cst {dimension_numbers = #tpu.dot_dimension_numbers<[1], [0], [0], [1], [0, 0, 1, 1], [], []>} : vector<32x16xf32>, vector<16x128xf32>, vector<32x128xf32> -> vector<32x128xf32>
    %c0_3 = arith.constant 0 : index
    %c0_4 = arith.constant 0 : index
    %3 = vector.load %arg2[%c0_3, %c0_4] : memref<32x8xf32, #tpu.memory_space<vmem>>, vector<32x8xf32>
    %c0_5 = arith.constant 0 : index
    %c0_6 = arith.constant 0 : index
    %4 = vector.load %arg5[%c0_5, %c0_6] : memref<8x128xf32, #tpu.memory_space<vmem>>, vector<8x128xf32>
    %cst_7 = arith.constant dense<0.000000e+00> : vector<32x128xf32>
    %5 = tpu.matmul %3, %4, %cst_7 {dimension_numbers = #tpu.dot_dimension_numbers<[1], [0], [0], [1], [0, 0, 1, 1], [], []>} : vector<32x8xf32>, vector<8x128xf32>, vector<32x128xf32> -> vector<32x128xf32>
    %6 = arith.addf %2, %5 : vector<32x128xf32>
    %c0_8 = arith.constant 0 : index
    %c0_9 = arith.constant 0 : index
    %7 = vector.load %arg3[%c0_8, %c0_9] : memref<32x1xf32, #tpu.memory_space<vmem>>, vector<32x1xf32>
    %c0_10 = arith.constant 0 : index
    %c0_11 = arith.constant 0 : index
    %8 = vector.load %arg6[%c0_10, %c0_11] : memref<1x128xf32, #tpu.memory_space<vmem>>, vector<1x128xf32>
    %9 = vector.broadcast %7 : vector<32x1xf32> to vector<32x128xf32>
    %10 = vector.broadcast %8 : vector<1x128xf32> to vector<32x128xf32>
    %11 = arith.mulf %9, %10 : vector<32x128xf32>
    %12 = arith.addf %6, %11 : vector<32x128xf32>
    %c0_12 = arith.constant 0 : index
    %c0_13 = arith.constant 0 : index
    %13 = vector.load %arg7[%c0_12, %c0_13] : memref<1x128xf32, #tpu.memory_space<vmem>>, vector<1x128xf32>
    %14 = vector.broadcast %13 : vector<1x128xf32> to vector<32x128xf32>
    %15 = arith.addf %12, %14 : vector<32x128xf32>
    %16 = arith.negf %15 : vector<32x128xf32>
    %17 = math.exp %16 : vector<32x128xf32>
    %cst_14 = arith.constant 1.000000e+00 : f32
    %18 = vector.broadcast %cst_14 : f32 to vector<32x128xf32>
    %19 = arith.addf %18, %17 : vector<32x128xf32>
    %20 = arith.divf %18, %19 : vector<32x128xf32>
    %21 = arith.mulf %15, %20 : vector<32x128xf32>
    %c0_15 = arith.constant 0 : index
    %c0_16 = arith.constant 0 : index
    %22 = vector.load %arg8[%c0_15, %c0_16] : memref<128x128xf32, #tpu.memory_space<vmem>>, vector<128x128xf32>
    %cst_17 = arith.constant dense<0.000000e+00> : vector<32x128xf32>
    %23 = tpu.matmul %21, %22, %cst_17 {dimension_numbers = #tpu.dot_dimension_numbers<[1], [0], [0], [1], [0, 0, 1, 1], [], []>} : vector<32x128xf32>, vector<128x128xf32>, vector<32x128xf32> -> vector<32x128xf32>
    %c0_18 = arith.constant 0 : index
    %c0_19 = arith.constant 0 : index
    %24 = vector.load %arg9[%c0_18, %c0_19] : memref<1x128xf32, #tpu.memory_space<vmem>>, vector<1x128xf32>
    %25 = vector.broadcast %24 : vector<1x128xf32> to vector<32x128xf32>
    %26 = arith.addf %23, %25 : vector<32x128xf32>
    %27 = arith.negf %26 : vector<32x128xf32>
    %28 = math.exp %27 : vector<32x128xf32>
    %cst_20 = arith.constant 1.000000e+00 : f32
    %29 = vector.broadcast %cst_20 : f32 to vector<32x128xf32>
    %30 = arith.addf %29, %28 : vector<32x128xf32>
    %31 = arith.divf %29, %30 : vector<32x128xf32>
    %32 = arith.mulf %26, %31 : vector<32x128xf32>
    %c0_21 = arith.constant 0 : index
    %c0_22 = arith.constant 0 : index
    %33 = vector.load %arg10[%c0_21, %c0_22] : memref<128x128xf32, #tpu.memory_space<vmem>>, vector<128x128xf32>
    %cst_23 = arith.constant dense<0.000000e+00> : vector<32x128xf32>
    %34 = tpu.matmul %32, %33, %cst_23 {dimension_numbers = #tpu.dot_dimension_numbers<[1], [0], [0], [1], [0, 0, 1, 1], [], []>} : vector<32x128xf32>, vector<128x128xf32>, vector<32x128xf32> -> vector<32x128xf32>
    %c0_24 = arith.constant 0 : index
    %c0_25 = arith.constant 0 : index
    %35 = vector.load %arg11[%c0_24, %c0_25] : memref<1x128xf32, #tpu.memory_space<vmem>>, vector<1x128xf32>
    %36 = vector.broadcast %35 : vector<1x128xf32> to vector<32x128xf32>
    %37 = arith.addf %34, %36 : vector<32x128xf32>
    %c0_26 = arith.constant 0 : index
    %c0_27 = arith.constant 0 : index
    %38 = vector.load %arg12[%c0_26, %c0_27] : memref<32x128xf32, #tpu.memory_space<vmem>>, vector<32x128xf32>
    tpu.vector_store %arg12[%c0_26, %c0_27], %37 {strides = array<i32>} : memref<32x128xf32, #tpu.memory_space<vmem>>, vector<32x128xf32>,
    return
  }
  func.func @transform_0(%arg0: i32) -> (i32, i32) {
    %c0_i32 = arith.constant 0 : i32
    %c0_i32_0 = arith.constant 0 : i32
    return %arg0, %c0_i32 : i32, i32
  }
  func.func @transform_1(%arg0: i32) -> (i32, i32) {
    %c0_i32 = arith.constant 0 : i32
    %c0_i32_0 = arith.constant 0 : i32
    return %arg0, %c0_i32 : i32, i32
  }
  func.func @transform_2(%arg0: i32) -> (i32, i32) {
    %c0_i32 = arith.constant 0 : i32
    %c0_i32_0 = arith.constant 0 : i32
    return %arg0, %c0_i32 : i32, i32
  }
  func.func @transform_3(%arg0: i32) -> (i32, i32) {
    %c0_i32 = arith.constant 0 : i32
    %c0_i32_0 = arith.constant 0 : i32
    %c0_i32_1 = arith.constant 0 : i32
    return %c0_i32, %c0_i32_0 : i32, i32
  }
  func.func @transform_4(%arg0: i32) -> (i32, i32) {
    %c0_i32 = arith.constant 0 : i32
    %c0_i32_0 = arith.constant 0 : i32
    %c0_i32_1 = arith.constant 0 : i32
    return %c0_i32, %c0_i32_0 : i32, i32
  }
  func.func @transform_5(%arg0: i32) -> (i32, i32) {
    %c0_i32 = arith.constant 0 : i32
    %c0_i32_0 = arith.constant 0 : i32
    %c0_i32_1 = arith.constant 0 : i32
    return %c0_i32, %c0_i32_0 : i32, i32
  }
  func.func @transform_6(%arg0: i32) -> (i32, i32) {
    %c0_i32 = arith.constant 0 : i32
    %c0_i32_0 = arith.constant 0 : i32
    %c0_i32_1 = arith.constant 0 : i32
    return %c0_i32, %c0_i32_0 : i32, i32
  }
  func.func @transform_7(%arg0: i32) -> (i32, i32) {
    %c0_i32 = arith.constant 0 : i32
    %c0_i32_0 = arith.constant 0 : i32
    %c0_i32_1 = arith.constant 0 : i32
    return %c0_i32, %c0_i32_0 : i32, i32
  }
  func.func @transform_8(%arg0: i32) -> (i32, i32) {
    %c0_i32 = arith.constant 0 : i32
    %c0_i32_0 = arith.constant 0 : i32
    %c0_i32_1 = arith.constant 0 : i32
    return %c0_i32, %c0_i32_0 : i32, i32
  }
  func.func @transform_9(%arg0: i32) -> (i32, i32) {
    %c0_i32 = arith.constant 0 : i32
    %c0_i32_0 = arith.constant 0 : i32
    %c0_i32_1 = arith.constant 0 : i32
    return %c0_i32, %c0_i32_0 : i32, i32
  }
  func.func @transform_10(%arg0: i32) -> (i32, i32) {
    %c0_i32 = arith.constant 0 : i32
    %c0_i32_0 = arith.constant 0 : i32
    %c0_i32_1 = arith.constant 0 : i32
    return %c0_i32, %c0_i32_0 : i32, i32
  }
  func.func @transform_11(%arg0: i32) -> (i32, i32) {
    %c0_i32 = arith.constant 0 : i32
    %c0_i32_0 = arith.constant 0 : i32
    return %arg0, %c0_i32 : i32, i32
  }
}

</mosaic_0001>

<llo_original>
// kernel: flow_matching_forward.1
$region0: #{flow_matching_forward.1}
  #allocation0 [shape = 'u32[]', space=smem, size = 0x4, offset = 0x4, fixed_abs, tag = 'smem constant byte address 0x4 - core index']
  #allocation1 [shape = 'u32[72,128]{1,0:T(1,128)}', space=vmem, size = 0x9000, scoped, tag = 'internal scratch']
  %s0 = inlined_call_operand.vmem [shape: f32[64,16], index: 0, kind: input, shape index: {}]
  %s1 = inlined_call_operand.vmem [shape: f32[64,8], index: 1, kind: input, shape index: {}]
  %s2 = inlined_call_operand.vmem [shape: f32[64,1], index: 2, kind: input, shape index: {}]
  %s3 = inlined_call_operand.vmem [shape: f32[16,128], index: 3, kind: input, shape index: {}]
  %s4 = inlined_call_operand.vmem [shape: f32[8,128], index: 4, kind: input, shape index: {}]
  %s5 = inlined_call_operand.vmem [shape: f32[1,128], index: 5, kind: input, shape index: {}]
  %s6 = inlined_call_operand.vmem [shape: f32[1,128], index: 6, kind: input, shape index: {}]
  %s7 = inlined_call_operand.vmem [shape: f32[128,128], index: 7, kind: input, shape index: {}]
  %s8 = inlined_call_operand.vmem [shape: f32[1,128], index: 8, kind: input, shape index: {}]
  %s9 = inlined_call_operand.hbm [shape: f32[128,128], index: 9, kind: input, shape index: {}]
  %s10 = inlined_call_operand.vmem [shape: f32[1,128], index: 10, kind: input, shape index: {}]
  %s11 = inlined_call_operand.vmem [shape: f32[64,128], index: 11, kind: output, shape index: {}]
  %s12 = sld [smem:[#allocation0]]
  $region81: #{flow_matching_forward.1} parent=0
    _
  %s14 = ssub.s32 1, %s12
  %s15 = scalar_select 0, %s14, %s12
  $region1: #{flow_matching_forward.1} parent=0
    #allocation2 [shape = 'u8[65536]{0}', space=vmem, size = 0x10000, scoped, tag = 'input window, operand 9, single buffered']
    #allocation3 [shape = 's32[2]{0}', space=sflag, size = 0x8, scoped, tag = 'scoped memory for flow_matching_forward.1']
    %16 = vsyncpa [#allocation3], 0
    loop: start=0, step=1, limit=4
    $region2: #{flow_matching_forward.1} parent=1 // loop_pre_header
      _
    $region3: #{flow_matching_forward.1} parent=1 // loop_header
      %s18 = sphi 0, %s22
      %p19 = scmp.ge.s32.totalorder %s18, 4
      %s28 = sphi 0, %s30
      %s31 = sphi 0, %s28
      %s32 = sphi 0, %s31
      %s48 = sphi 0, %s32
      %s54 = sphi 0, %s56
      %s57 = sphi 0, %s54
      %s58 = sphi 0, %s57
      %s74 = sphi 0, %s58
      %s80 = sphi 0, %s82
      %s83 = sphi 0, %s80
      %s84 = sphi 0, %s83
      %s100 = sphi 0, %s84
      %s104 = sphi 0, %s104
      %s106 = sphi 0, %s104
      %s107 = sphi 0, %s106
      %s121 = sphi 0, %s107
      %s125 = sphi 0, %s125
      %s127 = sphi 0, %s125
      %s128 = sphi 0, %s127
      %s142 = sphi 0, %s128
      %s146 = sphi 0, %s146
      %s148 = sphi 0, %s146
      %s149 = sphi 0, %s148
      %s163 = sphi 0, %s149
      %s167 = sphi 0, %s167
      %s169 = sphi 0, %s167
      %s170 = sphi 0, %s169
      %s184 = sphi 0, %s170
      %s188 = sphi 0, %s188
      %s190 = sphi 0, %s188
      %s191 = sphi 0, %s190
      %s205 = sphi 0, %s191
      %s209 = sphi 0, %s209
      %s211 = sphi 0, %s209
      %s212 = sphi 0, %s211
      %s226 = sphi 0, %s212
      %s230 = sphi 0, %s230
      %s232 = sphi 0, %s230
      %s233 = sphi 0, %s232
      %s247 = sphi 0, %s233
      %s251 = sphi 0, %s251
      %s253 = sphi 0, %s251
      %s254 = sphi 0, %s253
      %s268 = sphi 0, %s254
      %s274 = sphi 0, %s276
      %s277 = sphi 0, %s274
      %s278 = sphi 0, %s277
      %s294 = sphi 0, %s278
    $region4: #{flow_matching_forward.1} parent=1 // loop_header_branch
      %21 = sbr.rel (%p19) target = $region8
    $region5: #{flow_matching_forward.1} parent=1 // loop_body
      %s23 = ssub.s32 %s18, 1
      %s24 = ssub.s32 %s18, 2
      %s25 = sadd.s32 %s18, 1
      %s26 = ssub.s32 %s18, %s25
      %p27 = scmp.eq.s32.totalorder %s26, 0
      %s29 = sadd.s32 %s28, 1
      %s30 = scalar_select %p27, %s28, %s29
      %p33 = pneg %p27
      %p34 = scmp.eq.s32.totalorder %s18, 1
      %p35 = por %p33, %p34
      %p36 = scmp.ne.s32.totalorder %s28, %s31
      %p37 = scmp.eq.s32.totalorder %s18, 0
      %p38 = por %p36, %p37
      %p39 = scmp.ne.s32.totalorder %s28, %s31
      %p40 = scmp.eq.s32.totalorder %s23, 1
      %p41 = por %p39, %p40
      %p42 = scmp.ne.s32.totalorder %s31, %s32
      %p43 = scmp.eq.s32.totalorder %s23, 0
      %p44 = por %p42, %p43
      %p45 = scmp.ne.s32.totalorder %s31, %s32
      %p46 = scmp.eq.s32.totalorder %s24, 1
      %p47 = por %p45, %p46
      %p49 = scmp.ne.s32.totalorder %s32, %s48
      %p50 = scmp.eq.s32.totalorder %s24, 0
      %p51 = por %p49, %p50
      %s52 = ssub.s32 %s18, %s25
      %p53 = scmp.eq.s32.totalorder %s52, 0
      %s55 = sadd.s32 %s54, 1
      %s56 = scalar_select %p53, %s54, %s55
      %p59 = pneg %p53
      %p60 = scmp.eq.s32.totalorder %s18, 1
      %p61 = por %p59, %p60
      %p62 = scmp.ne.s32.totalorder %s54, %s57
      %p63 = scmp.eq.s32.totalorder %s18, 0
      %p64 = por %p62, %p63
      %p65 = scmp.ne.s32.totalorder %s54, %s57
      %p66 = scmp.eq.s32.totalorder %s23, 1
      %p67 = por %p65, %p66
      %p68 = scmp.ne.s32.totalorder %s57, %s58
      %p69 = scmp.eq.s32.totalorder %s23, 0
      %p70 = por %p68, %p69
      %p71 = scmp.ne.s32.totalorder %s57, %s58
      %p72 = scmp.eq.s32.totalorder %s24, 1
      %p73 = por %p71, %p72
      %p75 = scmp.ne.s32.totalorder %s58, %s74
      %p76 = scmp.eq.s32.totalorder %s24, 0
      %p77 = por %p75, %p76
      %s78 = ssub.s32 %s18, %s25
      %p79 = scmp.eq.s32.totalorder %s78, 0
      %s81 = sadd.s32 %s80, 1
      %s82 = scalar_select %p79, %s80, %s81
      %p85 = pneg %p79
      %p86 = scmp.eq.s32.totalorder %s18, 1
      %p87 = por %p85, %p86
      %p88 = scmp.ne.s32.totalorder %s80, %s83
      %p89 = scmp.eq.s32.totalorder %s18, 0
      %p90 = por %p88, %p89
      %p91 = scmp.ne.s32.totalorder %s80, %s83
      %p92 = scmp.eq.s32.totalorder %s23, 1
      %p93 = por %p91, %p92
      %p94 = scmp.ne.s32.totalorder %s83, %s84
      %p95 = scmp.eq.s32.totalorder %s23, 0
      %p96 = por %p94, %p95
      %p97 = scmp.ne.s32.totalorder %s83, %s84
      %p98 = scmp.eq.s32.totalorder %s24, 1
      %p99 = por %p97, %p98
      %p101 = scmp.ne.s32.totalorder %s84, %s100
      %p102 = scmp.eq.s32.totalorder %s24, 0
      %p103 = por %p101, %p102
      %s105 = sadd.s32 %s104, 1
      %p108 = scmp.eq.s32.totalorder %s18, 1
      %p109 = scmp.ne.s32.totalorder %s104, %s106
      %p110 = scmp.eq.s32.totalorder %s18, 0
      %p111 = por %p109, %p110
      %p112 = scmp.ne.s32.totalorder %s104, %s106
      %p113 = scmp.eq.s32.totalorder %s23, 1
      %p114 = por %p112, %p113
      %p115 = scmp.ne.s32.totalorder %s106, %s107
      %p116 = scmp.eq.s32.totalorder %s23, 0
      %p117 = por %p115, %p116
      %p118 = scmp.ne.s32.totalorder %s106, %s107
      %p119 = scmp.eq.s32.totalorder %s24, 1
      %p120 = por %p118, %p119
      %p122 = scmp.ne.s32.totalorder %s107, %s121
      %p123 = scmp.eq.s32.totalorder %s24, 0
      %p124 = por %p122, %p123
      %s126 = sadd.s32 %s125, 1
      %p129 = scmp.eq.s32.totalorder %s18, 1
      %p130 = scmp.ne.s32.totalorder %s125, %s127
      %p131 = scmp.eq.s32.totalorder %s18, 0
      %p132 = por %p130, %p131
      %p133 = scmp.ne.s32.totalorder %s125, %s127
      %p134 = scmp.eq.s32.totalorder %s23, 1
      %p135 = por %p133, %p134
      %p136 = scmp.ne.s32.totalorder %s127, %s128
      %p137 = scmp.eq.s32.totalorder %s23, 0
      %p138 = por %p136, %p137
      %p139 = scmp.ne.s32.totalorder %s127, %s128
      %p140 = scmp.eq.s32.totalorder %s24, 1
      %p141 = por %p139, %p140
      %p143 = scmp.ne.s32.totalorder %s128, %s142
      %p144 = scmp.eq.s32.totalorder %s24, 0
      %p145 = por %p143, %p144
      %s147 = sadd.s32 %s146, 1
      %p150 = scmp.eq.s32.totalorder %s18, 1
      %p151 = scmp.ne.s32.totalorder %s146, %s148
      %p152 = scmp.eq.s32.totalorder %s18, 0
      %p153 = por %p151, %p152
      %p154 = scmp.ne.s32.totalorder %s146, %s148
      %p155 = scmp.eq.s32.totalorder %s23, 1
      %p156 = por %p154, %p155
      %p157 = scmp.ne.s32.totalorder %s148, %s149
      %p158 = scmp.eq.s32.totalorder %s23, 0
      %p159 = por %p157, %p158
      %p160 = scmp.ne.s32.totalorder %s148, %s149
      %p161 = scmp.eq.s32.totalorder %s24, 1
      %p162 = por %p160, %p161
      %p164 = scmp.ne.s32.totalorder %s149, %s163
      %p165 = scmp.eq.s32.totalorder %s24, 0
      %p166 = por %p164, %p165
      %s168 = sadd.s32 %s167, 1
      %p171 = scmp.eq.s32.totalorder %s18, 1
      %p172 = scmp.ne.s32.totalorder %s167, %s169
      %p173 = scmp.eq.s32.totalorder %s18, 0
      %p174 = por %p172, %p173
      %p175 = scmp.ne.s32.totalorder %s167, %s169
      %p176 = scmp.eq.s32.totalorder %s23, 1
      %p177 = por %p175, %p176
      %p178 = scmp.ne.s32.totalorder %s169, %s170
      %p179 = scmp.eq.s32.totalorder %s23, 0
      %p180 = por %p178, %p179
      %p181 = scmp.ne.s32.totalorder %s169, %s170
      %p182 = scmp.eq.s32.totalorder %s24, 1
      %p183 = por %p181, %p182
      %p185 = scmp.ne.s32.totalorder %s170, %s184
      %p186 = scmp.eq.s32.totalorder %s24, 0
      %p187 = por %p185, %p186
      %s189 = sadd.s32 %s188, 1
      %p192 = scmp.eq.s32.totalorder %s18, 1
      %p193 = scmp.ne.s32.totalorder %s188, %s190
      %p194 = scmp.eq.s32.totalorder %s18, 0
      %p195 = por %p193, %p194
      %p196 = scmp.ne.s32.totalorder %s188, %s190
      %p197 = scmp.eq.s32.totalorder %s23, 1
      %p198 = por %p196, %p197
      %p199 = scmp.ne.s32.totalorder %s190, %s191
      %p200 = scmp.eq.s32.totalorder %s23, 0
      %p201 = por %p199, %p200
      %p202 = scmp.ne.s32.totalorder %s190, %s191
      %p203 = scmp.eq.s32.totalorder %s24, 1
      %p204 = por %p202, %p203
      %p206 = scmp.ne.s32.totalorder %s191, %s205
      %p207 = scmp.eq.s32.totalorder %s24, 0
      %p208 = por %p206, %p207
      %s210 = sadd.s32 %s209, 1
      %p213 = scmp.eq.s32.totalorder %s18, 1
      %p214 = scmp.ne.s32.totalorder %s209, %s211
      %p215 = scmp.eq.s32.totalorder %s18, 0
      %p216 = por %p214, %p215
      %p217 = scmp.ne.s32.totalorder %s209, %s211
      %p218 = scmp.eq.s32.totalorder %s23, 1
      %p219 = por %p217, %p218
      %p220 = scmp.ne.s32.totalorder %s211, %s212
      %p221 = scmp.eq.s32.totalorder %s23, 0
      %p222 = por %p220, %p221
      %p223 = scmp.ne.s32.totalorder %s211, %s212
      %p224 = scmp.eq.s32.totalorder %s24, 1
      %p225 = por %p223, %p224
      %p227 = scmp.ne.s32.totalorder %s212, %s226
      %p228 = scmp.eq.s32.totalorder %s24, 0
      %p229 = por %p227, %p228
      %s231 = sadd.s32 %s230, 1
      %p234 = scmp.eq.s32.totalorder %s18, 1
      %p235 = scmp.ne.s32.totalorder %s230, %s232
      %p236 = scmp.eq.s32.totalorder %s18, 0
      %p237 = por %p235, %p236
      %p238 = scmp.ne.s32.totalorder %s230, %s232
      %p239 = scmp.eq.s32.totalorder %s23, 1
      %p240 = por %p238, %p239
      %p241 = scmp.ne.s32.totalorder %s232, %s233
      %p242 = scmp.eq.s32.totalorder %s23, 0
      %p243 = por %p241, %p242
      %p244 = scmp.ne.s32.totalorder %s232, %s233
      %p245 = scmp.eq.s32.totalorder %s24, 1
      %p246 = por %p244, %p245
      %p248 = scmp.ne.s32.totalorder %s233, %s247
      %p249 = scmp.eq.s32.totalorder %s24, 0
      %p250 = por %p248, %p249
      %s252 = sadd.s32 %s251, 1
      %p255 = scmp.eq.s32.totalorder %s18, 1
      %p256 = scmp.ne.s32.totalorder %s251, %s253
      %p257 = scmp.eq.s32.totalorder %s18, 0
      %p258 = por %p256, %p257
      %p259 = scmp.ne.s32.totalorder %s251, %s253
      %p260 = scmp.eq.s32.totalorder %s23, 1
      %p261 = por %p259, %p260
      %p262 = scmp.ne.s32.totalorder %s253, %s254
      %p263 = scmp.eq.s32.totalorder %s23, 0
      %p264 = por %p262, %p263
      %p265 = scmp.ne.s32.totalorder %s253, %s254
      %p266 = scmp.eq.s32.totalorder %s24, 1
      %p267 = por %p265, %p266
      %p269 = scmp.ne.s32.totalorder %s254, %s268
      %p270 = scmp.eq.s32.totalorder %s24, 0
      %p271 = por %p269, %p270
      %s272 = ssub.s32 %s18, %s25
      %p273 = scmp.eq.s32.totalorder %s272, 0
      %s275 = sadd.s32 %s274, 1
      %s276 = scalar_select %p273, %s274, %s275
      %p279 = pneg %p273
      %p280 = scmp.eq.s32.totalorder %s18, 1
      %p281 = por %p279, %p280
      %p282 = scmp.ne.s32.totalorder %s274, %s277
      %p283 = scmp.eq.s32.totalorder %s18, 0
      %p284 = por %p282, %p283
      %p285 = scmp.ne.s32.totalorder %s274, %s277
      %p286 = scmp.eq.s32.totalorder %s23, 1
      %p287 = por %p285, %p286
      %p288 = scmp.ne.s32.totalorder %s277, %s278
      %p289 = scmp.eq.s32.totalorder %s23, 0
      %p290 = por %p288, %p289
      %p291 = scmp.ne.s32.totalorder %s277, %s278
      %p292 = scmp.eq.s32.totalorder %s24, 1
      %p293 = por %p291, %p292
      %p295 = scmp.ne.s32.totalorder %s278, %s294
      %p296 = scmp.eq.s32.totalorder %s24, 0
      %p297 = por %p295, %p296
      %p298 = scmp.le.s32.totalorder 1, %s18
      %p299 = scmp.lt.s32.totalorder %s18, 3
      %p300 = pnand %p298, %p299
      %p301 = pneg %p300
      // Predicated region
      $region9: #{flow_matching_forward.1} parent=5 // pred_check
        _
      $region10: #{flow_matching_forward.1} parent=5 // pred_check_branch
        %303 = sbr.rel (%p300) target = $region12
      $region11: #{flow_matching_forward.1} parent=5 // pred_region
        %s304 = ssub.s32 %s18, 1
        // Predicated region
        $region13: #{flow_matching_forward.1} parent=11 // pred_check
          %p305 = pneg %p117
        $region14: #{flow_matching_forward.1} parent=11 // pred_check_branch
          %307 = sbr.rel (%p305) target = $region16
        $region15: #{flow_matching_forward.1} parent=11 // pred_region
          _
        $region16: #{flow_matching_forward.1} parent=11 // pred_fallthru
          _
        // Predicated region
        $region17: #{flow_matching_forward.1} parent=11 // pred_check
          %p308 = pneg %p138
        $region18: #{flow_matching_forward.1} parent=11 // pred_check_branch
          %310 = sbr.rel (%p308) target = $region20
        $region19: #{flow_matching_forward.1} parent=11 // pred_region
          _
        $region20: #{flow_matching_forward.1} parent=11 // pred_fallthru
          _
        // Predicated region
        $region21: #{flow_matching_forward.1} parent=11 // pred_check
          %p311 = pneg %p159
        $region22: #{flow_matching_forward.1} parent=11 // pred_check_branch
          %313 = sbr.rel (%p311) target = $region24
        $region23: #{flow_matching_forward.1} parent=11 // pred_region
          _
        $region24: #{flow_matching_forward.1} parent=11 // pred_fallthru
          _
        // Predicated region
        $region25: #{flow_matching_forward.1} parent=11 // pred_check
          %p314 = pneg %p180
        $region26: #{flow_matching_forward.1} parent=11 // pred_check_branch
          %316 = sbr.rel (%p314) target = $region28
        $region27: #{flow_matching_forward.1} parent=11 // pred_region
          _
        $region28: #{flow_matching_forward.1} parent=11 // pred_fallthru
          _
        // Predicated region
        $region29: #{flow_matching_forward.1} parent=11 // pred_check
          %p317 = pneg %p201
        $region30: #{flow_matching_forward.1} parent=11 // pred_check_branch
          %319 = sbr.rel (%p317) target = $region32
        $region31: #{flow_matching_forward.1} parent=11 // pred_region
          _
        $region32: #{flow_matching_forward.1} parent=11 // pred_fallthru
          _
        // Predicated region
        $region33: #{flow_matching_forward.1} parent=11 // pred_check
          %p320 = pneg %p222
        $region34: #{flow_matching_forward.1} parent=11 // pred_check_branch
          %322 = sbr.rel (%p320) target = $region36
        $region35: #{flow_matching_forward.1} parent=11 // pred_region
          _
        $region36: #{flow_matching_forward.1} parent=11 // pred_fallthru
          _
        // Predicated region
        $region37: #{flow_matching_forward.1} parent=11 // pred_check
          %p323 = pneg %p243
        $region38: #{flow_matching_forward.1} parent=11 // pred_check_branch
          %325 = sbr.rel (%p323) target = $region40
        $region39: #{flow_matching_forward.1} parent=11 // pred_region
          %327 = vsyncadd [#allocation3], 0
          %s328 = sshll.u32 %s9, 4
          %s329 = int_to_ptr.hbm [resolvable:$true] %s328
          %s330 = sshll.u32 [#allocation2], 4
          %s331 = int_to_ptr.vmem [resolvable:$true] %s330
          %336 = dma.hbm_to_vmem [thread:$0]  %s329, 2048, %s331, [#allocation3], 128, 128, 8
        $region40: #{flow_matching_forward.1} parent=11 // pred_fallthru
          _
        // Predicated region
        $region41: #{flow_matching_forward.1} parent=11 // pred_check
          %p337 = pneg %p264
        $region42: #{flow_matching_forward.1} parent=11 // pred_check_branch
          %339 = sbr.rel (%p337) target = $region44
        $region43: #{flow_matching_forward.1} parent=11 // pred_region
          _
        $region44: #{flow_matching_forward.1} parent=11 // pred_fallthru
          _
      $region12: #{flow_matching_forward.1} parent=5 // pred_fallthru
        _
      %p340 = scmp.lt.s32.totalorder %s18, 2
      // Predicated region
      $region45: #{flow_matching_forward.1} parent=5 // pred_check
        %p341 = pneg %p340
      $region46: #{flow_matching_forward.1} parent=5 // pred_check_branch
        %343 = sbr.rel (%p341) target = $region48
      $region47: #{flow_matching_forward.1} parent=5 // pred_region
        // Predicated region
        $region49: #{flow_matching_forward.1} parent=47 // pred_check
          %p344 = pneg %p38
        $region50: #{flow_matching_forward.1} parent=47 // pred_check_branch
          %346 = sbr.rel (%p344) target = $region52
        $region51: #{flow_matching_forward.1} parent=47 // pred_region
          %s347 = smul.u32 4, %s18
          %p348 = scmp.lt.s32.totalorder %s347, 7
          %s349 = scalar_select %p348, %s347, 7
          %s350 = smul.addr %s349, 8
          %s351 = scalar_lea.vmem %s0, %s350
          %s352 = smul.u32 4, %s18
        $region52: #{flow_matching_forward.1} parent=47 // pred_fallthru
          _
        // Predicated region
        $region53: #{flow_matching_forward.1} parent=47 // pred_check
          %p353 = pneg %p64
        $region54: #{flow_matching_forward.1} parent=47 // pred_check_branch
          %355 = sbr.rel (%p353) target = $region56
        $region55: #{flow_matching_forward.1} parent=47 // pred_region
          %s356 = smul.u32 4, %s18
          %p357 = scmp.lt.s32.totalorder %s356, 7
          %s358 = scalar_select %p357, %s356, 7
          %s359 = smul.addr %s358, 8
          %s360 = scalar_lea.vmem %s1, %s359
          %s361 = smul.u32 4, %s18
        $region56: #{flow_matching_forward.1} parent=47 // pred_fallthru
          _
        // Predicated region
        $region57: #{flow_matching_forward.1} parent=47 // pred_check
          %p362 = pneg %p90
        $region58: #{flow_matching_forward.1} parent=47 // pred_check_branch
          %364 = sbr.rel (%p362) target = $region60
        $region59: #{flow_matching_forward.1} parent=47 // pred_region
          %s365 = smul.u32 4, %s18
          %p366 = scmp.lt.s32.totalorder %s365, 7
          %s367 = scalar_select %p366, %s365, 7
          %s368 = smul.addr %s367, 8
          %s369 = scalar_lea.vmem %s2, %s368
          %s370 = smul.u32 4, %s18
        $region60: #{flow_matching_forward.1} parent=47 // pred_fallthru
          _
      $region48: #{flow_matching_forward.1} parent=5 // pred_fallthru
        _
      %p371 = scmp.le.s32.totalorder 1, %s18
      %p372 = scmp.lt.s32.totalorder %s18, 3
      %p373 = pnand %p371, %p372
      %p374 = pneg %p373
      // Predicated region
      $region61: #{flow_matching_forward.1} parent=5 // pred_check
        _
      $region62: #{flow_matching_forward.1} parent=5 // pred_check_branch
        %376 = sbr.rel (%p373) target = $region64
      $region63: #{flow_matching_forward.1} parent=5 // pred_region
        %s377 = ssub.s32 %s18, 1
        // Predicated region
        $region65: #{flow_matching_forward.1} parent=63 // pred_check
          %p378 = pneg %p243
        $region66: #{flow_matching_forward.1} parent=63 // pred_check_branch
          %380 = sbr.rel (%p378) target = $region68
        $region67: #{flow_matching_forward.1} parent=63 // pred_region
          %382 = dma.done [#allocation3], 2048
        $region68: #{flow_matching_forward.1} parent=63 // pred_fallthru
          _
        %s383 = smul.u32 4, %s23
        %p384 = scmp.lt.s32.totalorder %s383, 7
        %s385 = scalar_select %p384, %s383, 7
        %s386 = smul.addr %s385, 8
        %s387 = scalar_lea.vmem %s0, %s386
        %p388 = pneg %p44
        %p389 = pneg %p41
        %s390 = smul.u32 4, %s23
        %p391 = scmp.lt.s32.totalorder %s390, 7
        %s392 = scalar_select %p391, %s390, 7
        %s393 = smul.addr %s392, 8
        %s394 = scalar_lea.vmem %s1, %s393
        %p395 = pneg %p70
        %p396 = pneg %p67
        %s397 = smul.u32 4, %s23
        %p398 = scmp.lt.s32.totalorder %s397, 7
        %s399 = scalar_select %p398, %s397, 7
        %s400 = smul.addr %s399, 8
        %s401 = scalar_lea.vmem %s2, %s400
        %p402 = pneg %p96
        %p403 = pneg %p93
        %p404 = pneg %p117
        %p405 = pneg %p114
        %p406 = pneg %p138
        %p407 = pneg %p135
        %p408 = pneg %p159
        %p409 = pneg %p156
        %p410 = pneg %p180
        %p411 = pneg %p177
        %p412 = pneg %p201
        %p413 = pneg %p198
        %p414 = pneg %p222
        %p415 = pneg %p219
        %p416 = pneg %p243
        %p417 = pneg %p240
        %p418 = pneg %p264
        %p419 = pneg %p261
        %p420 = pneg %p290
        %p421 = pneg %p287
        %s422 = smul.u32 4, %s23
        %p423 = scmp.lt.s32.totalorder %s422, 7
        %s424 = scalar_select %p423, %s422, 7
        %s425 = smul.addr %s424, 8
        %s426 = scalar_lea.vmem %s11, %s425
        %s427 = smul.u32 4, %s23
        %p428 = scmp.lt.s32.totalorder %s427, 7
        %s429 = scalar_select %p428, %s427, 7
        %s430 = smul.addr %s429, 8
        %s431 = scalar_lea.vmem %s0, %s430
        %s432 = smul.u32 4, %s23
        %s433 = smul.u32 4, %s23
        %p434 = scmp.lt.s32.totalorder %s433, 7
        %s435 = scalar_select %p434, %s433, 7
        %s436 = smul.addr %s435, 8
        %s437 = scalar_lea.vmem %s1, %s436
        %s438 = smul.u32 4, %s23
        %s439 = smul.u32 4, %s23
        %p440 = scmp.lt.s32.totalorder %s439, 7
        %s441 = scalar_select %p440, %s439, 7
        %s442 = smul.addr %s441, 8
        %s443 = scalar_lea.vmem %s2, %s442
        %s444 = smul.u32 4, %s23
        %s445 = smul.u32 4, %s23
        %p446 = scmp.lt.s32.totalorder %s445, 7
        %s447 = scalar_select %p446, %s445, 7
        %s448 = smul.addr %s447, 8
        %s449 = scalar_lea.vmem %s11, %s448
        %s450 = smul.u32 4, %s23
        %v451 = vld [vmem:[%s431] sm:$0xff]
        %v452 = vld [vmem:[%s431 + $0x8] sm:$0xff]
        %v453 = vld [vmem:[%s431 + $0x10] sm:$0xff]
        %v454 = vld [vmem:[%s431 + $0x18] sm:$0xff]
        %v455 = vld [vmem:[%s3] sm:$0xff]
        %v456 = vld [vmem:[%s3 + $0x8] sm:$0xff]
        %v457 = vld [vmem:[%s437] sm:$0xff]
        %v458 = vld [vmem:[%s437 + $0x8] sm:$0xff]
        %v459 = vld [vmem:[%s437 + $0x10] sm:$0xff]
        %v460 = vld [vmem:[%s437 + $0x18] sm:$0xff]
        %v461 = vld [vmem:[%s4] sm:$0xff]
        %vm462 = vcmask 64512
        %v464 = vsel %vm462, %v457, 0
        %v467 = vsel %vm462, %v458, 0
        %v470 = vsel %vm462, %v459, 0
        %v473 = vsel %vm462, %v460, 0
        %475 = vmatpush.msra.mxu0 0.0
        %476 = vmatpush.msra.mxu0 0.0
        %477 = vmatpush.msra.mxu0 0.0
        %478 = vmatpush.msra.mxu0 0.0
        %479 = vmatpush.msra.mxu0 0.0
        %480 = vmatpush.msra.mxu0 0.0
        %481 = vmatpush.msra.mxu0 0.0
        %482 = vmatpush.msra.mxu0 0.0
        %483 = vmatpush.msra.mxu0 0.0
        %484 = vmatpush.msra.mxu0 0.0
        %485 = vmatpush.msra.mxu0 0.0
        %486 = vmatpush.msra.mxu0 0.0
        %487 = vmatpush.msra.mxu0 0.0
        %488 = vmatpush.msra.mxu0 0.0
        %489 = vmatpush.msra.mxu0 0.0
        %490 = vmatpush.msra.mxu0 %v461
        %491 = vmatmul.f32.gmra.mxu0 %v464
        %v492 = vpop.f32.mrf.mxu0
        %v493 = vadd.f32 0.0, %v492
        %494 = vmatmul.f32.gmra.mxu0 %v467
        %v495 = vpop.f32.mrf.mxu0
        %v496 = vadd.f32 0.0, %v495
        %497 = vmatmul.f32.gmra.mxu0 %v470
        %v498 = vpop.f32.mrf.mxu0
        %v499 = vadd.f32 0.0, %v498
        %500 = vmatmul.f32.gmra.mxu0 %v473
        %v501 = vpop.f32.mrf.mxu0
        %v502 = vadd.f32 0.0, %v501
        %503 = vdwg.mxu0
        %vm504 = vcmask 130048
        %v506 = vsel %vm504, %v451, 0
        %v509 = vsel %vm504, %v452, 0
        %v512 = vsel %vm504, %v453, 0
        %v515 = vsel %vm504, %v454, 0
        %517 = vmatpush.msra.mxu0 0.0
        %518 = vmatpush.msra.mxu0 0.0
        %519 = vmatpush.msra.mxu0 0.0
        %520 = vmatpush.msra.mxu0 0.0
        %521 = vmatpush.msra.mxu0 0.0
        %522 = vmatpush.msra.mxu0 0.0
        %523 = vmatpush.msra.mxu0 0.0
        %524 = vmatpush.msra.mxu0 0.0
        %525 = vmatpush.msra.mxu0 0.0
        %526 = vmatpush.msra.mxu0 0.0
        %527 = vmatpush.msra.mxu0 0.0
        %528 = vmatpush.msra.mxu0 0.0
        %529 = vmatpush.msra.mxu0 0.0
        %530 = vmatpush.msra.mxu0 0.0
        %531 = vmatpush.msra.mxu0 %v456
        %532 = vmatpush.msra.mxu0 %v455
        %533 = vmatmul.f32.gmra.mxu0 %v506
        %v534 = vpop.f32.mrf.mxu0
        %v535 = vadd.f32 %v493, %v534
        %536 = vmatmul.f32.gmra.mxu0 %v509
        %v537 = vpop.f32.mrf.mxu0
        %v538 = vadd.f32 %v496, %v537
        %539 = vmatmul.f32.gmra.mxu0 %v512
        %v540 = vpop.f32.mrf.mxu0
        %v541 = vadd.f32 %v499, %v540
        %542 = vmatmul.f32.gmra.mxu0 %v515
        %v543 = vpop.f32.mrf.mxu0
        %v544 = vadd.f32 %v502, %v543
        %545 = vdwg.mxu0
        %v546 = vld [vmem:[%s443] sm:$0xff]
        %v547 = vld [vmem:[%s443 + $0x8] sm:$0xff]
        %v548 = vld [vmem:[%s443 + $0x10] sm:$0xff]
        %v549 = vld [vmem:[%s443 + $0x18] sm:$0xff]
        %v550 = vld [vmem:[%s5] sm:$0x1]
        %552 = vset.pattern.permute.xlu0 0
        %553 = vperm.xlu0 %552, %v546
        %v554 = vpop.permute.xlu0 %553
        %557 = vset.pattern.permute.xlu0 0
        %558 = vperm.xlu0 %557, %v547
        %v559 = vpop.permute.xlu0 %558
        %562 = vset.pattern.permute.xlu0 0
        %563 = vperm.xlu0 %562, %v548
        %v564 = vpop.permute.xlu0 %563
        %567 = vset.pattern.permute.xlu0 0
        %568 = vperm.xlu0 %567, %v549
        %v569 = vpop.permute.xlu0 %568
        %v572 = vperm.slane %v550, 0
        %v574 = vmul.f32 %v554, %v572
        %v575 = vmul.f32 %v559, %v572
        %v576 = vmul.f32 %v564, %v572
        %v577 = vmul.f32 %v569, %v572
        %v578 = vadd.f32 %v535, %v574
        %v579 = vadd.f32 %v538, %v575
        %v580 = vadd.f32 %v541, %v576
        %v581 = vadd.f32 %v544, %v577
        %v582 = vld [vmem:[%s6] sm:$0x1]
        %v584 = vperm.slane %v582, 0
        %v586 = vadd.f32 %v578, %v584
        %v587 = vadd.f32 %v579, %v584
        %v588 = vadd.f32 %v580, %v584
        %v589 = vadd.f32 %v581, %v584
        %v590 = vxor.u32 %v586, 2147483648
        %v591 = vxor.u32 %v587, 2147483648
        %v592 = vxor.u32 %v588, 2147483648
        %v593 = vxor.u32 %v589, 2147483648
        %v594 = vmul.f32 %v590, 1.442695
        %v595 = vpow.pop %v594
        %v596 = vmul.f32 %v591, 1.442695
        %v597 = vpow.pop %v596
        %v598 = vmul.f32 %v592, 1.442695
        %v599 = vpow.pop %v598
        %v600 = vmul.f32 %v593, 1.442695
        %v601 = vpow.pop %v600
        %v602 = vadd.f32 %v595, 1.0
        %v603 = vadd.f32 %v597, 1.0
        %v604 = vadd.f32 %v599, 1.0
        %v605 = vadd.f32 %v601, 1.0
        %v606 = vrcp.pop %v602
        %v607 = vmul.f32 %v602, %v606
        %v608 = vsub.f32 1.0, %v607
        %v609 = vmul.f32 %v606, %v608
        %v610 = vadd.f32 %v606, %v609
        %vm611 = vweird.f32 %v602
        %vm612 = vweird.f32 %v606
        %vm613 = vmor %vm611, %vm612
        %v614 = vsel %vm613, %v606, %v610
        %v615 = vand.u32 2147483647, %v602
        %vm616 = vcmp.eq.f32.partialorder %v615, 8.507059e+37
        %v617 = vand.u32 %v602, 2147483648
        %v618 = vor.u32 1.1754944e-38, %v617
        %v619 = vsel %vm616, %v618, %v614
        %v620 = vmul.f32 1.0, %v619
        %v621 = vrcp.pop %v603
        %v622 = vmul.f32 %v603, %v621
        %v623 = vsub.f32 1.0, %v622
        %v624 = vmul.f32 %v621, %v623
        %v625 = vadd.f32 %v621, %v624
        %vm626 = vweird.f32 %v603
        %vm627 = vweird.f32 %v621
        %vm628 = vmor %vm626, %vm627
        %v629 = vsel %vm628, %v621, %v625
        %v630 = vand.u32 2147483647, %v603
        %vm631 = vcmp.eq.f32.partialorder %v630, 8.507059e+37
        %v632 = vand.u32 %v603, 2147483648
        %v633 = vor.u32 1.1754944e-38, %v632
        %v634 = vsel %vm631, %v633, %v629
        %v635 = vmul.f32 1.0, %v634
        %v636 = vrcp.pop %v604
        %v637 = vmul.f32 %v604, %v636
        %v638 = vsub.f32 1.0, %v637
        %v639 = vmul.f32 %v636, %v638
        %v640 = vadd.f32 %v636, %v639
        %vm641 = vweird.f32 %v604
        %vm642 = vweird.f32 %v636
        %vm643 = vmor %vm641, %vm642
        %v644 = vsel %vm643, %v636, %v640
        %v645 = vand.u32 2147483647, %v604
        %vm646 = vcmp.eq.f32.partialorder %v645, 8.507059e+37
        %v647 = vand.u32 %v604, 2147483648
        %v648 = vor.u32 1.1754944e-38, %v647
        %v649 = vsel %vm646, %v648, %v644
        %v650 = vmul.f32 1.0, %v649
        %v651 = vrcp.pop %v605
        %v652 = vmul.f32 %v605, %v651
        %v653 = vsub.f32 1.0, %v652
        %v654 = vmul.f32 %v651, %v653
        %v655 = vadd.f32 %v651, %v654
        %vm656 = vweird.f32 %v605
        %vm657 = vweird.f32 %v651
        %vm658 = vmor %vm656, %vm657
        %v659 = vsel %vm658, %v651, %v655
        %v660 = vand.u32 2147483647, %v605
        %vm661 = vcmp.eq.f32.partialorder %v660, 8.507059e+37
        %v662 = vand.u32 %v605, 2147483648
        %v663 = vor.u32 1.1754944e-38, %v662
        %v664 = vsel %vm661, %v663, %v659
        %v665 = vmul.f32 1.0, %v664
        %v666 = vmul.f32 %v586, %v620
        %v667 = vmul.f32 %v587, %v635
        %v668 = vmul.f32 %v588, %v650
        %v669 = vmul.f32 %v589, %v665
        %v670 = vld [vmem:[%s7] sm:$0xff]
        %v671 = vld [vmem:[%s7 + $0x8] sm:$0xff]
        %v672 = vld [vmem:[%s7 + $0x10] sm:$0xff]
        %v673 = vld [vmem:[%s7 + $0x18] sm:$0xff]
        %v674 = vld [vmem:[%s7 + $0x20] sm:$0xff]
        %v675 = vld [vmem:[%s7 + $0x28] sm:$0xff]
        %v676 = vld [vmem:[%s7 + $0x30] sm:$0xff]
        %v677 = vld [vmem:[%s7 + $0x38] sm:$0xff]
        %v678 = vld [vmem:[%s7 + $0x40] sm:$0xff]
        %v679 = vld [vmem:[%s7 + $0x48] sm:$0xff]
        %v680 = vld [vmem:[%s7 + $0x50] sm:$0xff]
        %v681 = vld [vmem:[%s7 + $0x58] sm:$0xff]
        %v682 = vld [vmem:[%s7 + $0x60] sm:$0xff]
        %v683 = vld [vmem:[%s7 + $0x68] sm:$0xff]
        %v684 = vld [vmem:[%s7 + $0x70] sm:$0xff]
        %v685 = vld [vmem:[%s7 + $0x78] sm:$0xff]
        %v686 = vld [vmem:[%s8] sm:$0x1]
        %v688 = vperm.slane %v686, 0
        %690 = vmatpush.msra.mxu0 %v685
        %691 = vmatpush.msra.mxu0 %v684
        %692 = vmatpush.msra.mxu0 %v683
        %693 = vmatpush.msra.mxu0 %v682
        %694 = vmatpush.msra.mxu0 %v681
        %695 = vmatpush.msra.mxu0 %v680
        %696 = vmatpush.msra.mxu0 %v679
        %697 = vmatpush.msra.mxu0 %v678
        %698 = vmatpush.msra.mxu0 %v677
        %699 = vmatpush.msra.mxu0 %v676
        %700 = vmatpush.msra.mxu0 %v675
        %701 = vmatpush.msra.mxu0 %v674
        %702 = vmatpush.msra.mxu0 %v673
        %703 = vmatpush.msra.mxu0 %v672
        %704 = vmatpush.msra.mxu0 %v671
        %705 = vmatpush.msra.mxu0 %v670
        %706 = vmatmul.f32.gmra.mxu0 %v666
        %v707 = vpop.f32.mrf.mxu0
        %v708 = vadd.f32 %v688, %v707
        %709 = vmatmul.f32.gmra.mxu0 %v667
        %v710 = vpop.f32.mrf.mxu0
        %v711 = vadd.f32 %v688, %v710
        %712 = vmatmul.f32.gmra.mxu0 %v668
        %v713 = vpop.f32.mrf.mxu0
        %v714 = vadd.f32 %v688, %v713
        %715 = vmatmul.f32.gmra.mxu0 %v669
        %v716 = vpop.f32.mrf.mxu0
        %v717 = vadd.f32 %v688, %v716
        %718 = vdwg.mxu0
        %v719 = vxor.u32 %v708, 2147483648
        %v720 = vxor.u32 %v711, 2147483648
        %v721 = vxor.u32 %v714, 2147483648
        %v722 = vxor.u32 %v717, 2147483648
        %v723 = vmul.f32 %v719, 1.442695
        %v724 = vpow.pop %v723
        %v725 = vmul.f32 %v720, 1.442695
        %v726 = vpow.pop %v725
        %v727 = vmul.f32 %v721, 1.442695
        %v728 = vpow.pop %v727
        %v729 = vmul.f32 %v722, 1.442695
        %v730 = vpow.pop %v729
        %v731 = vadd.f32 %v724, 1.0
        %v732 = vadd.f32 %v726, 1.0
        %v733 = vadd.f32 %v728, 1.0
        %v734 = vadd.f32 %v730, 1.0
        %v735 = vrcp.pop %v731
        %v736 = vmul.f32 %v731, %v735
        %v737 = vsub.f32 1.0, %v736
        %v738 = vmul.f32 %v735, %v737
        %v739 = vadd.f32 %v735, %v738
        %vm740 = vweird.f32 %v731
        %vm741 = vweird.f32 %v735
        %vm742 = vmor %vm740, %vm741
        %v743 = vsel %vm742, %v735, %v739
        %v744 = vand.u32 2147483647, %v731
        %vm745 = vcmp.eq.f32.partialorder %v744, 8.507059e+37
        %v746 = vand.u32 %v731, 2147483648
        %v747 = vor.u32 1.1754944e-38, %v746
        %v748 = vsel %vm745, %v747, %v743
        %v749 = vmul.f32 1.0, %v748
        %v750 = vrcp.pop %v732
        %v751 = vmul.f32 %v732, %v750
        %v752 = vsub.f32 1.0, %v751
        %v753 = vmul.f32 %v750, %v752
        %v754 = vadd.f32 %v750, %v753
        %vm755 = vweird.f32 %v732
        %vm756 = vweird.f32 %v750
        %vm757 = vmor %vm755, %vm756
        %v758 = vsel %vm757, %v750, %v754
        %v759 = vand.u32 2147483647, %v732
        %vm760 = vcmp.eq.f32.partialorder %v759, 8.507059e+37
        %v761 = vand.u32 %v732, 2147483648
        %v762 = vor.u32 1.1754944e-38, %v761
        %v763 = vsel %vm760, %v762, %v758
        %v764 = vmul.f32 1.0, %v763
        %v765 = vrcp.pop %v733
        %v766 = vmul.f32 %v733, %v765
        %v767 = vsub.f32 1.0, %v766
        %v768 = vmul.f32 %v765, %v767
        %v769 = vadd.f32 %v765, %v768
        %vm770 = vweird.f32 %v733
        %vm771 = vweird.f32 %v765
        %vm772 = vmor %vm770, %vm771
        %v773 = vsel %vm772, %v765, %v769
        %v774 = vand.u32 2147483647, %v733
        %vm775 = vcmp.eq.f32.partialorder %v774, 8.507059e+37
        %v776 = vand.u32 %v733, 2147483648
        %v777 = vor.u32 1.1754944e-38, %v776
        %v778 = vsel %vm775, %v777, %v773
        %v779 = vmul.f32 1.0, %v778
        %v780 = vrcp.pop %v734
        %v781 = vmul.f32 %v734, %v780
        %v782 = vsub.f32 1.0, %v781
        %v783 = vmul.f32 %v780, %v782
        %v784 = vadd.f32 %v780, %v783
        %vm785 = vweird.f32 %v734
        %vm786 = vweird.f32 %v780
        %vm787 = vmor %vm785, %vm786
        %v788 = vsel %vm787, %v780, %v784
        %v789 = vand.u32 2147483647, %v734
        %vm790 = vcmp.eq.f32.partialorder %v789, 8.507059e+37
        %v791 = vand.u32 %v734, 2147483648
        %v792 = vor.u32 1.1754944e-38, %v791
        %v793 = vsel %vm790, %v792, %v788
        %v794 = vmul.f32 1.0, %v793
        %v795 = vmul.f32 %v708, %v749
        %v796 = vmul.f32 %v711, %v764
        %v797 = vmul.f32 %v714, %v779
        %v798 = vmul.f32 %v717, %v794
        %v799 = vld [vmem:[#allocation2] sm:$0xff]
        %v800 = vld [vmem:[#allocation2 + $0x8] sm:$0xff]
        %v801 = vld [vmem:[#allocation2 + $0x10] sm:$0xff]
        %v802 = vld [vmem:[#allocation2 + $0x18] sm:$0xff]
        %v803 = vld [vmem:[#allocation2 + $0x20] sm:$0xff]
        %v804 = vld [vmem:[#allocation2 + $0x28] sm:$0xff]
        %v805 = vld [vmem:[#allocation2 + $0x30] sm:$0xff]
        %v806 = vld [vmem:[#allocation2 + $0x38] sm:$0xff]
        %v807 = vld [vmem:[#allocation2 + $0x40] sm:$0xff]
        %v808 = vld [vmem:[#allocation2 + $0x48] sm:$0xff]
        %v809 = vld [vmem:[#allocation2 + $0x50] sm:$0xff]
        %v810 = vld [vmem:[#allocation2 + $0x58] sm:$0xff]
        %v811 = vld [vmem:[#allocation2 + $0x60] sm:$0xff]
        %v812 = vld [vmem:[#allocation2 + $0x68] sm:$0xff]
        %v813 = vld [vmem:[#allocation2 + $0x70] sm:$0xff]
        %v814 = vld [vmem:[#allocation2 + $0x78] sm:$0xff]
        %v815 = vld [vmem:[%s10] sm:$0x1]
        %v817 = vperm.slane %v815, 0
        %819 = vmatpush.msra.mxu0 %v814
        %820 = vmatpush.msra.mxu0 %v813
        %821 = vmatpush.msra.mxu0 %v812
        %822 = vmatpush.msra.mxu0 %v811
        %823 = vmatpush.msra.mxu0 %v810
        %824 = vmatpush.msra.mxu0 %v809
        %825 = vmatpush.msra.mxu0 %v808
        %826 = vmatpush.msra.mxu0 %v807
        %827 = vmatpush.msra.mxu0 %v806
        %828 = vmatpush.msra.mxu0 %v805
        %829 = vmatpush.msra.mxu0 %v804
        %830 = vmatpush.msra.mxu0 %v803
        %831 = vmatpush.msra.mxu0 %v802
        %832 = vmatpush.msra.mxu0 %v801
        %833 = vmatpush.msra.mxu0 %v800
        %834 = vmatpush.msra.mxu0 %v799
        %835 = vmatmul.f32.gmra.mxu0 %v795
        %v836 = vpop.f32.mrf.mxu0
        %v837 = vadd.f32 %v817, %v836
        %838 = vmatmul.f32.gmra.mxu0 %v796
        %v839 = vpop.f32.mrf.mxu0
        %v840 = vadd.f32 %v817, %v839
        %841 = vmatmul.f32.gmra.mxu0 %v797
        %v842 = vpop.f32.mrf.mxu0
        %v843 = vadd.f32 %v817, %v842
        %844 = vmatmul.f32.gmra.mxu0 %v798
        %v845 = vpop.f32.mrf.mxu0
        %v846 = vadd.f32 %v817, %v845
        %847 = vdwg.mxu0
        %848 = vst [vmem:[%s449] sm:$0xff] %v837
        %849 = vst [vmem:[%s449 + $0x8] sm:$0xff] %v840
        %850 = vst [vmem:[%s449 + $0x10] sm:$0xff] %v843
        %851 = vst [vmem:[%s449 + $0x18] sm:$0xff] %v846
        %s852 = smul.u32 4, %s23
        %p853 = scmp.lt.s32.totalorder %s852, 7
        %s854 = scalar_select %p853, %s852, 7
        %s855 = smul.addr %s854, 8
        %s856 = scalar_lea.vmem %s11, %s855
        // Predicated region
        $region69: #{flow_matching_forward.1} parent=63 // pred_check
          %p857 = pneg %p287
        $region70: #{flow_matching_forward.1} parent=63 // pred_check_branch
          %859 = sbr.rel (%p857) target = $region72
        $region71: #{flow_matching_forward.1} parent=63 // pred_region
          %s860 = smul.u32 4, %s23
        $region72: #{flow_matching_forward.1} parent=63 // pred_fallthru
          _
      $region64: #{flow_matching_forward.1} parent=5 // pred_fallthru
        _
      %p861 = scmp.le.s32.totalorder 2, %s18
      // Predicated region
      $region73: #{flow_matching_forward.1} parent=5 // pred_check
        %p862 = pneg %p861
      $region74: #{flow_matching_forward.1} parent=5 // pred_check_branch
        %864 = sbr.rel (%p862) target = $region76
      $region75: #{flow_matching_forward.1} parent=5 // pred_region
        %s865 = ssub.s32 %s18, 2
        // Predicated region
        $region77: #{flow_matching_forward.1} parent=75 // pred_check
          %p866 = pneg %p293
        $region78: #{flow_matching_forward.1} parent=75 // pred_check_branch
          %868 = sbr.rel (%p866) target = $region80
        $region79: #{flow_matching_forward.1} parent=75 // pred_region
          %s869 = smul.u32 4, %s24
          %p870 = scmp.lt.s32.totalorder %s869, 7
          %s871 = scalar_select %p870, %s869, 7
          %s872 = smul.addr %s871, 8
          %s873 = scalar_lea.vmem %s11, %s872
        $region80: #{flow_matching_forward.1} parent=75 // pred_fallthru
          _
      $region76: #{flow_matching_forward.1} parent=5 // pred_fallthru
        _
    $region6: #{flow_matching_forward.1} parent=1 // loop_footer
      %s22 = sadd.s32 1, %s18
    $region7: #{flow_matching_forward.1} parent=1 // loop_footer_branch
      %17 = sbr.rel target = $region3
    $region8: #{flow_matching_forward.1} parent=1 // loop_exit
      _
    %874 = vsyncpa [#allocation3], 1
    %s875 = scalar_lea.sflag [#allocation3], 1
    %876 = vsyncpa %s875, 1

</llo_original>
